<compile_context>
chip_gen: v7x
topology: tpu7x:2x2x1
jax: 0.10.0
libtpu: 0.0.40
codegen_flags: <defaults>
</compile_context>

<pallas_src>
import functools

import jax
import jax.numpy as jnp
from jax.experimental import pallas as pl
from jax.experimental.pallas import tpu as pltpu


def _lrelu(x):  # LeakyReLU(0.01)
    return jnp.where(x >= 0, x, 0.01 * x)


def _front(obs, act, w1, b1, w2x, w2a, b2, mx):
    """linear_c1 + lrelu + linear_c2 (concat split into two MXU dots)."""
    x1 = _lrelu(jnp.dot(mx(obs), w1, preferred_element_type=jnp.float32) + b1)
    z2 = (jnp.dot(mx(x1), w2x, preferred_element_type=jnp.float32)
          + jnp.dot(mx(act), w2a, preferred_element_type=jnp.float32)
          + b2)
    return z2


# ---------------------------------------------------------------------------
# Single-pass kernel: whole batch resident in VMEM.
# ---------------------------------------------------------------------------
def _critic_single_kernel(obs_ref, act_ref,
                          w1_ref, b1_ref,
                          w2x_ref, w2a_ref, b2_ref,
                          g1_ref, be1_ref,
                          w3_ref, b3_ref,
                          g2_ref, be2_ref,
                          w4r_ref, b4_ref,
                          out_ref,
                          *, inv_batch, compute_dtype):
    eps = jnp.float32(1e-5)

    def mx(x):  # cast at MXU boundary only (bf16 fast path on v6e/v7x)
        return x.astype(compute_dtype)

    z2 = _front(obs_ref[...], act_ref[...], w1_ref[...], b1_ref[...],
                w2x_ref[...], w2a_ref[...], b2_ref[...], mx)

    # bn1 (train-mode whole-batch statistics), folded into scale/shift
    mu1 = jnp.sum(z2, axis=0, keepdims=True) * inv_batch
    var1 = jnp.sum(z2 * z2, axis=0, keepdims=True) * inv_batch - mu1 * mu1
    sc1 = g1_ref[...] * jax.lax.rsqrt(var1 + eps)
    h1a = _lrelu(z2 * sc1 + (be1_ref[...] - mu1 * sc1))

    z3 = (jnp.dot(mx(h1a), w3_ref[...], preferred_element_type=jnp.float32)
          + b3_ref[...])

    # bn2
    mu2 = jnp.sum(z3, axis=0, keepdims=True) * inv_batch
    var2 = jnp.sum(z3 * z3, axis=0, keepdims=True) * inv_batch - mu2 * mu2
    sc2 = g2_ref[...] * jax.lax.rsqrt(var2 + eps)
    h2a = _lrelu(z3 * sc2 + (be2_ref[...] - mu2 * sc2))

    # final (h2 -> 1) layer: VPU multiply + lane reduction (avoids a 1-column
    # MXU dot and masked stores through the MXU result path)
    out_ref[...] = (jnp.sum(h2a * w4r_ref[...], axis=-1, keepdims=True)
                    + b4_ref[...])


# ---------------------------------------------------------------------------
# Tiled multi-pass kernel: exact BN statistics across batch tiles.
# ---------------------------------------------------------------------------
def _critic_tiled_kernel(obs_ref, act_ref,
                         w1_ref, b1_ref,
                         w2x_ref, w2a_ref, b2_ref,
                         g1_ref, be1_ref,
                         w3_ref, b3_ref,
                         g2_ref, be2_ref,
                         w4r_ref, b4_ref,
                         out_ref,
                         s1, q1, sc1, sh1, s2, q2, sc2, sh2,
                         *, inv_batch, compute_dtype):
    eps = jnp.float32(1e-5)
    p = pl.program_id(0)        # 0: bn1 stats, 1: bn2 stats, 2: write output
    i = pl.program_id(1)        # batch tile index
    n_tiles = pl.num_programs(1)

    def mx(x):
        return x.astype(compute_dtype)

    # layers 1 & 2 (recomputed each pass; trivial FLOPs vs storing activations)
    z2 = _front(obs_ref[...], act_ref[...], w1_ref[...], b1_ref[...],
                w2x_ref[...], w2a_ref[...], b2_ref[...], mx)

    @pl.when(p == 0)
    def _pass0():
        @pl.when(i == 0)
        def _():
            s1[...] = jnp.zeros_like(s1)
            q1[...] = jnp.zeros_like(q1)

        s1[...] += jnp.sum(z2, axis=0, keepdims=True)
        q1[...] += jnp.sum(z2 * z2, axis=0, keepdims=True)

        @pl.when(i == n_tiles - 1)
        def _():
            mu = s1[...] * inv_batch
            var = q1[...] * inv_batch - mu * mu
            sc = g1_ref[...] * jax.lax.rsqrt(var + eps)
            sc1[...] = sc
            sh1[...] = be1_ref[...] - mu * sc

        out_ref[...] = jnp.zeros_like(out_ref)   # overwritten in pass 2

    @pl.when(p > 0)
    def _pass12():
        h1a = _lrelu(z2 * sc1[...] + sh1[...])   # folded bn1 + LeakyReLU
        z3 = (jnp.dot(mx(h1a), w3_ref[...], preferred_element_type=jnp.float32)
              + b3_ref[...])

        @pl.when(p == 1)
        def _pass1():
            @pl.when(i == 0)
            def _():
                s2[...] = jnp.zeros_like(s2)
                q2[...] = jnp.zeros_like(q2)

            s2[...] += jnp.sum(z3, axis=0, keepdims=True)
            q2[...] += jnp.sum(z3 * z3, axis=0, keepdims=True)

            @pl.when(i == n_tiles - 1)
            def _():
                mu = s2[...] * inv_batch
                var = q2[...] * inv_batch - mu * mu
                sc = g2_ref[...] * jax.lax.rsqrt(var + eps)
                sc2[...] = sc
                sh2[...] = be2_ref[...] - mu * sc

            out_ref[...] = jnp.zeros_like(out_ref)   # overwritten in pass 2

        @pl.when(p == 2)
        def _pass2():
            h2a = _lrelu(z3 * sc2[...] + sh2[...])   # folded bn2 + LeakyReLU
            out_ref[...] = (jnp.sum(h2a * w4r_ref[...], axis=-1, keepdims=True)
                            + b4_ref[...])


def _pick_tile_b(B, tile_b):
    """Largest valid batch tile; whole batch when it is small enough."""
    if tile_b is not None:
        if 0 < tile_b < B and B % tile_b == 0 and tile_b % 8 == 0:
            return tile_b
        return B
    if B <= 4096 or B % 8 != 0:
        return B
    t = 4096
    while t >= 8:
        if B % t == 0:
            return t
        t -= 8
    return B


def critic_agent_forward(obs, act, params, *, tile_b=None,
                         compute_dtype=jnp.float32):
    """obs: (B, obs_dim) f32, act: (B, act_dim) f32. Returns (B, 1) f32."""
    B, obs_dim = obs.shape
    act_dim = act.shape[1]
    h0 = params["w1"].shape[1]
    h1 = params["w2x"].shape[1]
    h2 = params["w3"].shape[1]

    # BatchNorm needs exact whole-batch statistics, so batch tiles must cover
    # B exactly (no padded rows) and satisfy the (8,128) sublane rule.
    tile_b = _pick_tile_b(B, tile_b)
    n_tiles = B // tile_b

    f32 = jnp.float32
    wc = lambda w: w.astype(compute_dtype)
    w4_row = params["w4"].reshape(1, h2).astype(f32)

    args = (
        obs, act,
        wc(params["w1"]), params["b1"].astype(f32),
        wc(params["w2x"]), wc(params["w2a"]), params["b2"].astype(f32),
        params["g1"].astype(f32), params["be1"].astype(f32),
        wc(params["w3"]), params["b3"].astype(f32),
        params["g2"].astype(f32), params["be2"].astype(f32),
        w4_row, params["b4"].astype(f32),
    )

    param_bytes = sum(int(a.size) * jnp.dtype(a.dtype).itemsize
                      for a in args[2:])
    front_flops = obs_dim * h0 + (h0 + act_dim) * h1

    if n_tiles == 1:
        # ---- single-pass fast path: everything resident, no recompute ----
        def full_spec(arr):
            return pl.BlockSpec(arr.shape, lambda i: (0, 0))

        kernel = functools.partial(_critic_single_kernel,
                                   inv_batch=1.0 / B,
                                   compute_dtype=compute_dtype)
        cost = pl.CostEstimate(
            flops=int(2 * B * (front_flops + h1 * h2 + h2)),
            transcendentals=int(h1 + h2),
            bytes_accessed=int(B * (obs_dim + act_dim) * 4 + B * 4
                               + param_bytes),
        )
        return pl.pallas_call(
            kernel,
            out_shape=jax.ShapeDtypeStruct((B, 1), jnp.float32),
            grid_spec=pltpu.PrefetchScalarGridSpec(
                num_scalar_prefetch=0,
                grid=(1,),
                in_specs=[full_spec(a) for a in args],
                out_specs=pl.BlockSpec((B, 1), lambda i: (0, 0)),
            ),
            compiler_params=pltpu.CompilerParams(
                dimension_semantics=("arbitrary",)),
            cost_estimate=cost,
        )(*args)

    # ---- tiled multi-pass path ----
    def batch_spec(arr):
        return pl.BlockSpec((tile_b, arr.shape[1]), lambda p, i: (i, 0))

    def param_spec(arr):
        # same block index every step -> weights stay resident in VMEM
        return pl.BlockSpec(arr.shape, lambda p, i: (0, 0))

    in_specs = ([batch_spec(obs), batch_spec(act)]
                + [param_spec(a) for a in args[2:]])
    out_spec = pl.BlockSpec((tile_b, 1), lambda p, i: (i, 0))

    scratch_shapes = [
        pltpu.VMEM((1, h1), f32), pltpu.VMEM((1, h1), f32),   # s1, q1
        pltpu.VMEM((1, h1), f32), pltpu.VMEM((1, h1), f32),   # sc1, sh1
        pltpu.VMEM((1, h2), f32), pltpu.VMEM((1, h2), f32),   # s2, q2
        pltpu.VMEM((1, h2), f32), pltpu.VMEM((1, h2), f32),   # sc2, sh2
    ]

    kernel = functools.partial(_critic_tiled_kernel,
                               inv_batch=1.0 / B,
                               compute_dtype=compute_dtype)

    cost = pl.CostEstimate(
        flops=int(2 * B * (3 * front_flops + 2 * h1 * h2 + h2)),
        transcendentals=int(h1 + h2),
        bytes_accessed=int(3 * B * (obs_dim + act_dim) * 4 + 3 * B * 4
                           + param_bytes),
    )

    return pl.pallas_call(
        kernel,
        out_shape=jax.ShapeDtypeStruct((B, 1), jnp.float32),
        grid_spec=pltpu.PrefetchScalarGridSpec(
            num_scalar_prefetch=0,
            grid=(3, n_tiles),
            in_specs=in_specs,
            out_specs=out_spec,
            scratch_shapes=scratch_shapes,
        ),
        # Both axes carry BN state in VMEM scratch -> sequential ("arbitrary").
        compiler_params=pltpu.CompilerParams(
            dimension_semantics=("arbitrary", "arbitrary")),
        cost_estimate=cost,
    )(*args)


def init_params(key, obs_dim, act_dim, num_units_c):
    h0, h1, h2 = num_units_c

    def xavier(key, fan_in, fan_out):
        bound = (6.0 / (fan_in + fan_out)) ** 0.5
        # stored as (in, out) == W.T of the PyTorch (out, in) weight
        return jax.random.uniform(key, (fan_in, fan_out), jnp.float32,
                                  minval=-bound, maxval=bound)

    def bias(key, fan_in, fan_out):
        bound = 1.0 / (fan_in ** 0.5)
        return jax.random.uniform(key, (1, fan_out), jnp.float32,
                                  minval=-bound, maxval=bound)

    ks = jax.random.split(key, 12)
    w2_full = xavier(ks[2], h0 + act_dim, h1)  # xavier over the concat fan-in
    params = {
        "w1": xavier(ks[0], obs_dim, h0),
        "b1": bias(ks[1], obs_dim, h0),
        "w2x": w2_full[:h0, :],
        "w2a": w2_full[h0:, :],
        "b2": bias(ks[3], h0 + act_dim, h1),
        "w3": xavier(ks[4], h1, h2),
        "b3": bias(ks[5], h1, h2),
        "w4": xavier(ks[6], h2, 1),
        "b4": bias(ks[7], h2, 1),
        # BatchNorm affine params (deterministic non-trivial values)
        "g1": 1.0 + 0.1 * jax.random.normal(ks[8], (1, h1), jnp.float32),
        "be1": 0.1 * jax.random.normal(ks[9], (1, h1), jnp.float32),
        "g2": 1.0 + 0.1 * jax.random.normal(ks[10], (1, h2), jnp.float32),
        "be2": 0.1 * jax.random.normal(ks[11], (1, h2), jnp.float32),
    }
    return params


def _reference(obs, act, p, compute_dtype=jnp.float32):
    c = lambda x: x.astype(compute_dtype)

    def lrelu(x):
        return jnp.where(x >= 0, x, 0.01 * x)

    def bn(x, g, b):
        mu = x.mean(0, keepdims=True)
        var = ((x - mu) ** 2).mean(0, keepdims=True)
        return (x - mu) / jnp.sqrt(var + 1e-5) * g + b

    x = lrelu(jnp.dot(c(obs), c(p["w1"]),
                      preferred_element_type=jnp.float32) + p["b1"])
    x = (jnp.dot(c(x), c(p["w2x"]), preferred_element_type=jnp.float32)
         + jnp.dot(c(act), c(p["w2a"]), preferred_element_type=jnp.float32)
         + p["b2"])
    x = lrelu(bn(x, p["g1"], p["be1"]))
    x = jnp.dot(c(x), c(p["w3"]), preferred_element_type=jnp.float32) + p["b3"]
    x = lrelu(bn(x, p["g2"], p["be2"]))
    return x @ p["w4"] + p["b4"]


if __name__ == "__main__":
    key = jax.random.PRNGKey(0)
    k_obs, k_act, k_par = jax.random.split(key, 3)

    B, obs_dim, act_dim = 64, 16, 8
    num_units_c = (32, 32, 32)

    obs = jax.random.normal(k_obs, (B, obs_dim), jnp.float32)
    act = jax.random.normal(k_act, (B, act_dim), jnp.float32)
    params = init_params(k_par, obs_dim, act_dim, num_units_c)
    ref = _reference(obs, act, params)

    # Single-pass resident path (the common case).
    value = critic_agent_forward(obs, act, params)
    value = jax.block_until_ready(value)
    assert value.shape == (B, 1)
    assert jnp.allclose(value, ref, atol=1e-4, rtol=1e-4), (
        float(jnp.max(jnp.abs(value - ref))))

    # Tiled path with 4 batch tiles -> exercises the cross-tile BN reduction.
    value_t = critic_agent_forward(obs, act, params, tile_b=16)
    value_t = jax.block_until_ready(value_t)
    assert jnp.allclose(value_t, ref, atol=1e-4, rtol=1e-4), (
        float(jnp.max(jnp.abs(value_t - ref))))

    # bf16 MXU-operand path (v6e/v7x fast path), f32 accumulation/elementwise.
    value_bf16 = critic_agent_forward(obs, act, params, tile_b=16,
                                      compute_dtype=jnp.bfloat16)
    value_bf16 = jax.block_until_ready(value_bf16)
    ref_bf16 = _reference(obs, act, params, compute_dtype=jnp.bfloat16)
    assert jnp.allclose(value_bf16, ref_bf16, atol=5e-3, rtol=5e-3), (
        float(jnp.max(jnp.abs(value_bf16 - ref_bf16))))

    print("KERNEL_OK")
</pallas_src>

<mosaic_0001>
module attributes {stable_mosaic.version = 11 : i64} {
  func.func @_critic_single_kernel(%arg0: i32, %arg1: memref<64x16xf32, #tpu.memory_space<vmem>>, %arg2: memref<64x8xf32, #tpu.memory_space<vmem>>, %arg3: memref<16x32xf32, #tpu.memory_space<vmem>>, %arg4: memref<1x32xf32, #tpu.memory_space<vmem>>, %arg5: memref<32x32xf32, #tpu.memory_space<vmem>>, %arg6: memref<8x32xf32, #tpu.memory_space<vmem>>, %arg7: memref<1x32xf32, #tpu.memory_space<vmem>>, %arg8: memref<1x32xf32, #tpu.memory_space<vmem>>, %arg9: memref<1x32xf32, #tpu.memory_space<vmem>>, %arg10: memref<32x32xf32, #tpu.memory_space<vmem>>, %arg11: memref<1x32xf32, #tpu.memory_space<vmem>>, %arg12: memref<1x32xf32, #tpu.memory_space<vmem>>, %arg13: memref<1x32xf32, #tpu.memory_space<vmem>>, %arg14: memref<1x32xf32, #tpu.memory_space<vmem>>, %arg15: memref<1x1xf32, #tpu.memory_space<vmem>>, %arg16: memref<64x1xf32, #tpu.memory_space<vmem>>) attributes {dimension_semantics = [#tpu.dimension_semantics<arbitrary>], iteration_bounds = array<i64: 1>, scalar_prefetch = 0 : i64, scratch_operands = 0 : i64, tpu.core_type = #tpu.core_type<tc>, window_params = [{pipeline_mode = #tpu.pipeline_mode<synchronous>, transform_indices = @transform_0, window_bounds = array<i64: 64, 16>}, {pipeline_mode = #tpu.pipeline_mode<synchronous>, transform_indices = @transform_1, window_bounds = array<i64: 64, 8>}, {pipeline_mode = #tpu.pipeline_mode<synchronous>, transform_indices = @transform_2, window_bounds = array<i64: 16, 32>}, {pipeline_mode = #tpu.pipeline_mode<synchronous>, transform_indices = @transform_3, window_bounds = array<i64: 1, 32>}, {pipeline_mode = #tpu.pipeline_mode<synchronous>, transform_indices = @transform_4, window_bounds = array<i64: 32, 32>}, {pipeline_mode = #tpu.pipeline_mode<synchronous>, transform_indices = @transform_5, window_bounds = array<i64: 8, 32>}, {pipeline_mode = #tpu.pipeline_mode<synchronous>, transform_indices = @transform_6, window_bounds = array<i64: 1, 32>}, {pipeline_mode = #tpu.pipeline_mode<synchronous>, transform_indices = @transform_7, window_bounds = array<i64: 1, 32>}, {pipeline_mode = #tpu.pipeline_mode<synchronous>, transform_indices = @transform_8, window_bounds = array<i64: 1, 32>}, {pipeline_mode = #tpu.pipeline_mode<synchronous>, transform_indices = @transform_9, window_bounds = array<i64: 32, 32>}, {pipeline_mode = #tpu.pipeline_mode<synchronous>, transform_indices = @transform_10, window_bounds = array<i64: 1, 32>}, {pipeline_mode = #tpu.pipeline_mode<synchronous>, transform_indices = @transform_11, window_bounds = array<i64: 1, 32>}, {pipeline_mode = #tpu.pipeline_mode<synchronous>, transform_indices = @transform_12, window_bounds = array<i64: 1, 32>}, {pipeline_mode = #tpu.pipeline_mode<synchronous>, transform_indices = @transform_13, window_bounds = array<i64: 1, 32>}, {pipeline_mode = #tpu.pipeline_mode<synchronous>, transform_indices = @transform_14, window_bounds = array<i64: 1, 1>}, {pipeline_mode = #tpu.pipeline_mode<synchronous>, transform_indices = @transform_15, window_bounds = array<i64: 64, 1>}]} {
    %c0 = arith.constant 0 : index
    %c0_0 = arith.constant 0 : index
    %0 = vector.load %arg1[%c0, %c0_0] : memref<64x16xf32, #tpu.memory_space<vmem>>, vector<64x16xf32>
    %c0_1 = arith.constant 0 : index
    %c0_2 = arith.constant 0 : index
    %1 = vector.load %arg2[%c0_1, %c0_2] : memref<64x8xf32, #tpu.memory_space<vmem>>, vector<64x8xf32>
    %c0_3 = arith.constant 0 : index
    %c0_4 = arith.constant 0 : index
    %2 = vector.load %arg3[%c0_3, %c0_4] : memref<16x32xf32, #tpu.memory_space<vmem>>, vector<16x32xf32>
    %c0_5 = arith.constant 0 : index
    %c0_6 = arith.constant 0 : index
    %3 = vector.load %arg4[%c0_5, %c0_6] : memref<1x32xf32, #tpu.memory_space<vmem>>, vector<1x32xf32>
    %c0_7 = arith.constant 0 : index
    %c0_8 = arith.constant 0 : index
    %4 = vector.load %arg5[%c0_7, %c0_8] : memref<32x32xf32, #tpu.memory_space<vmem>>, vector<32x32xf32>
    %c0_9 = arith.constant 0 : index
    %c0_10 = arith.constant 0 : index
    %5 = vector.load %arg6[%c0_9, %c0_10] : memref<8x32xf32, #tpu.memory_space<vmem>>, vector<8x32xf32>
    %c0_11 = arith.constant 0 : index
    %c0_12 = arith.constant 0 : index
    %6 = vector.load %arg7[%c0_11, %c0_12] : memref<1x32xf32, #tpu.memory_space<vmem>>, vector<1x32xf32>
    %cst = arith.constant dense<0.000000e+00> : vector<64x32xf32>
    %7 = tpu.matmul %0, %2, %cst {dimension_numbers = #tpu.dot_dimension_numbers<[1], [0], [0], [1], [0, 0, 1, 1], [], []>} : vector<64x16xf32>, vector<16x32xf32>, vector<64x32xf32> -> vector<64x32xf32>
    %8 = vector.broadcast %3 : vector<1x32xf32> to vector<64x32xf32>
    %9 = arith.addf %7, %8 : vector<64x32xf32>
    %cst_13 = arith.constant 0.000000e+00 : f32
    %10 = vector.broadcast %cst_13 : f32 to vector<64x32xf32>
    %11 = arith.cmpf oge, %9, %10 : vector<64x32xf32>
    %cst_14 = arith.constant 0.00999999977 : f32
    %12 = vector.broadcast %cst_14 : f32 to vector<64x32xf32>
    %13 = arith.mulf %12, %9 : vector<64x32xf32>
    %14 = arith.select %11, %9, %13 : vector<64x32xi1>, vector<64x32xf32>
    %cst_15 = arith.constant dense<0.000000e+00> : vector<64x32xf32>
    %15 = tpu.matmul %14, %4, %cst_15 {dimension_numbers = #tpu.dot_dimension_numbers<[1], [0], [0], [1], [0, 0, 1, 1], [], []>} : vector<64x32xf32>, vector<32x32xf32>, vector<64x32xf32> -> vector<64x32xf32>
    %cst_16 = arith.constant dense<0.000000e+00> : vector<64x32xf32>
    %16 = tpu.matmul %1, %5, %cst_16 {dimension_numbers = #tpu.dot_dimension_numbers<[1], [0], [0], [1], [0, 0, 1, 1], [], []>} : vector<64x8xf32>, vector<8x32xf32>, vector<64x32xf32> -> vector<64x32xf32>
    %17 = arith.addf %15, %16 : vector<64x32xf32>
    %18 = vector.broadcast %6 : vector<1x32xf32> to vector<64x32xf32>
    %19 = arith.addf %17, %18 : vector<64x32xf32>
    %cst_17 = arith.constant dense<0.000000e+00> : vector<32xf32>
    %20 = vector.multi_reduction <add>, %19, %cst_17 [0] : vector<64x32xf32> to vector<32xf32>
    %21 = vector.shape_cast %20 : vector<32xf32> to vector<1x32xf32>
    %cst_18 = arith.constant 1.562500e-02 : f32
    %22 = vector.broadcast %cst_18 : f32 to vector<1x32xf32>
    %23 = arith.mulf %21, %22 : vector<1x32xf32>
    %24 = arith.mulf %19, %19 : vector<64x32xf32>
    %cst_19 = arith.constant dense<0.000000e+00> : vector<32xf32>
    %25 = vector.multi_reduction <add>, %24, %cst_19 [0] : vector<64x32xf32> to vector<32xf32>
    %26 = vector.shape_cast %25 : vector<32xf32> to vector<1x32xf32>
    %cst_20 = arith.constant 1.562500e-02 : f32
    %27 = vector.broadcast %cst_20 : f32 to vector<1x32xf32>
    %28 = arith.mulf %26, %27 : vector<1x32xf32>
    %29 = arith.mulf %23, %23 : vector<1x32xf32>
    %30 = arith.subf %28, %29 : vector<1x32xf32>
    %c0_21 = arith.constant 0 : index
    %c0_22 = arith.constant 0 : index
    %31 = vector.load %arg8[%c0_21, %c0_22] : memref<1x32xf32, #tpu.memory_space<vmem>>, vector<1x32xf32>
    %cst_23 = arith.constant 9.99999974E-6 : f32
    %32 = vector.broadcast %cst_23 : f32 to vector<1x32xf32>
    %33 = arith.addf %30, %32 : vector<1x32xf32>
    %34 = math.rsqrt %33 : vector<1x32xf32>
    %35 = arith.mulf %31, %34 : vector<1x32xf32>
    %36 = vector.broadcast %35 : vector<1x32xf32> to vector<64x32xf32>
    %37 = arith.mulf %19, %36 : vector<64x32xf32>
    %c0_24 = arith.constant 0 : index
    %c0_25 = arith.constant 0 : index
    %38 = vector.load %arg9[%c0_24, %c0_25] : memref<1x32xf32, #tpu.memory_space<vmem>>, vector<1x32xf32>
    %39 = arith.mulf %23, %35 : vector<1x32xf32>
    %40 = arith.subf %38, %39 : vector<1x32xf32>
    %41 = vector.broadcast %40 : vector<1x32xf32> to vector<64x32xf32>
    %42 = arith.addf %37, %41 : vector<64x32xf32>
    %cst_26 = arith.constant 0.000000e+00 : f32
    %43 = vector.broadcast %cst_26 : f32 to vector<64x32xf32>
    %44 = arith.cmpf oge, %42, %43 : vector<64x32xf32>
    %cst_27 = arith.constant 0.00999999977 : f32
    %45 = vector.broadcast %cst_27 : f32 to vector<64x32xf32>
    %46 = arith.mulf %45, %42 : vector<64x32xf32>
    %47 = arith.select %44, %42, %46 : vector<64x32xi1>, vector<64x32xf32>
    %c0_28 = arith.constant 0 : index
    %c0_29 = arith.constant 0 : index
    %48 = vector.load %arg10[%c0_28, %c0_29] : memref<32x32xf32, #tpu.memory_space<vmem>>, vector<32x32xf32>
    %cst_30 = arith.constant dense<0.000000e+00> : vector<64x32xf32>
    %49 = tpu.matmul %47, %48, %cst_30 {dimension_numbers = #tpu.dot_dimension_numbers<[1], [0], [0], [1], [0, 0, 1, 1], [], []>} : vector<64x32xf32>, vector<32x32xf32>, vector<64x32xf32> -> vector<64x32xf32>
    %c0_31 = arith.constant 0 : index
    %c0_32 = arith.constant 0 : index
    %50 = vector.load %arg11[%c0_31, %c0_32] : memref<1x32xf32, #tpu.memory_space<vmem>>, vector<1x32xf32>
    %51 = vector.broadcast %50 : vector<1x32xf32> to vector<64x32xf32>
    %52 = arith.addf %49, %51 : vector<64x32xf32>
    %cst_33 = arith.constant dense<0.000000e+00> : vector<32xf32>
    %53 = vector.multi_reduction <add>, %52, %cst_33 [0] : vector<64x32xf32> to vector<32xf32>
    %54 = vector.shape_cast %53 : vector<32xf32> to vector<1x32xf32>
    %cst_34 = arith.constant 1.562500e-02 : f32
    %55 = vector.broadcast %cst_34 : f32 to vector<1x32xf32>
    %56 = arith.mulf %54, %55 : vector<1x32xf32>
    %57 = arith.mulf %52, %52 : vector<64x32xf32>
    %cst_35 = arith.constant dense<0.000000e+00> : vector<32xf32>
    %58 = vector.multi_reduction <add>, %57, %cst_35 [0] : vector<64x32xf32> to vector<32xf32>
    %59 = vector.shape_cast %58 : vector<32xf32> to vector<1x32xf32>
    %cst_36 = arith.constant 1.562500e-02 : f32
    %60 = vector.broadcast %cst_36 : f32 to vector<1x32xf32>
    %61 = arith.mulf %59, %60 : vector<1x32xf32>
    %62 = arith.mulf %56, %56 : vector<1x32xf32>
    %63 = arith.subf %61, %62 : vector<1x32xf32>
    %c0_37 = arith.constant 0 : index
    %c0_38 = arith.constant 0 : index
    %64 = vector.load %arg12[%c0_37, %c0_38] : memref<1x32xf32, #tpu.memory_space<vmem>>, vector<1x32xf32>
    %cst_39 = arith.constant 9.99999974E-6 : f32
    %65 = vector.broadcast %cst_39 : f32 to vector<1x32xf32>
    %66 = arith.addf %63, %65 : vector<1x32xf32>
    %67 = math.rsqrt %66 : vector<1x32xf32>
    %68 = arith.mulf %64, %67 : vector<1x32xf32>
    %69 = vector.broadcast %68 : vector<1x32xf32> to vector<64x32xf32>
    %70 = arith.mulf %52, %69 : vector<64x32xf32>
    %c0_40 = arith.constant 0 : index
    %c0_41 = arith.constant 0 : index
    %71 = vector.load %arg13[%c0_40, %c0_41] : memref<1x32xf32, #tpu.memory_space<vmem>>, vector<1x32xf32>
    %72 = arith.mulf %56, %68 : vector<1x32xf32>
    %73 = arith.subf %71, %72 : vector<1x32xf32>
    %74 = vector.broadcast %73 : vector<1x32xf32> to vector<64x32xf32>
    %75 = arith.addf %70, %74 : vector<64x32xf32>
    %cst_42 = arith.constant 0.000000e+00 : f32
    %76 = vector.broadcast %cst_42 : f32 to vector<64x32xf32>
    %77 = arith.cmpf oge, %75, %76 : vector<64x32xf32>
    %cst_43 = arith.constant 0.00999999977 : f32
    %78 = vector.broadcast %cst_43 : f32 to vector<64x32xf32>
    %79 = arith.mulf %78, %75 : vector<64x32xf32>
    %80 = arith.select %77, %75, %79 : vector<64x32xi1>, vector<64x32xf32>
    %c0_44 = arith.constant 0 : index
    %c0_45 = arith.constant 0 : index
    %81 = vector.load %arg14[%c0_44, %c0_45] : memref<1x32xf32, #tpu.memory_space<vmem>>, vector<1x32xf32>
    %82 = vector.broadcast %81 : vector<1x32xf32> to vector<64x32xf32>
    %83 = arith.mulf %80, %82 : vector<64x32xf32>
    %cst_46 = arith.constant dense<0.000000e+00> : vector<64xf32>
    %84 = vector.multi_reduction <add>, %83, %cst_46 [1] : vector<64x32xf32> to vector<64xf32>
    %85 = vector.shape_cast %84 : vector<64xf32> to vector<64x1xf32>
    %c0_47 = arith.constant 0 : index
    %c0_48 = arith.constant 0 : index
    %86 = vector.load %arg15[%c0_47, %c0_48] : memref<1x1xf32, #tpu.memory_space<vmem>>, vector<1x1xf32>
    %87 = vector.broadcast %86 : vector<1x1xf32> to vector<64x1xf32>
    %88 = arith.addf %85, %87 : vector<64x1xf32>
    %c0_49 = arith.constant 0 : index
    %c0_50 = arith.constant 0 : index
    %89 = vector.load %arg16[%c0_49, %c0_50] : memref<64x1xf32, #tpu.memory_space<vmem>>, vector<64x1xf32>
    tpu.vector_store %arg16[%c0_49, %c0_50], %88 {strides = array<i32>} : memref<64x1xf32, #tpu.memory_space<vmem>>, vector<64x1xf32>,
    return
  }
  func.func @transform_0(%arg0: i32) -> (i32, i32) {
    %c0_i32 = arith.constant 0 : i32
    %c0_i32_0 = arith.constant 0 : i32
    %c0_i32_1 = arith.constant 0 : i32
    return %c0_i32, %c0_i32_0 : i32, i32
  }
  func.func @transform_1(%arg0: i32) -> (i32, i32) {
    %c0_i32 = arith.constant 0 : i32
    %c0_i32_0 = arith.constant 0 : i32
    %c0_i32_1 = arith.constant 0 : i32
    return %c0_i32, %c0_i32_0 : i32, i32
  }
  func.func @transform_2(%arg0: i32) -> (i32, i32) {
    %c0_i32 = arith.constant 0 : i32
    %c0_i32_0 = arith.constant 0 : i32
    %c0_i32_1 = arith.constant 0 : i32
    return %c0_i32, %c0_i32_0 : i32, i32
  }
  func.func @transform_3(%arg0: i32) -> (i32, i32) {
    %c0_i32 = arith.constant 0 : i32
    %c0_i32_0 = arith.constant 0 : i32
    %c0_i32_1 = arith.constant 0 : i32
    return %c0_i32, %c0_i32_0 : i32, i32
  }
  func.func @transform_4(%arg0: i32) -> (i32, i32) {
    %c0_i32 = arith.constant 0 : i32
    %c0_i32_0 = arith.constant 0 : i32
    %c0_i32_1 = arith.constant 0 : i32
    return %c0_i32, %c0_i32_0 : i32, i32
  }
  func.func @transform_5(%arg0: i32) -> (i32, i32) {
    %c0_i32 = arith.constant 0 : i32
    %c0_i32_0 = arith.constant 0 : i32
    %c0_i32_1 = arith.constant 0 : i32
    return %c0_i32, %c0_i32_0 : i32, i32
  }
  func.func @transform_6(%arg0: i32) -> (i32, i32) {
    %c0_i32 = arith.constant 0 : i32
    %c0_i32_0 = arith.constant 0 : i32
    %c0_i32_1 = arith.constant 0 : i32
    return %c0_i32, %c0_i32_0 : i32, i32
  }
  func.func @transform_7(%arg0: i32) -> (i32, i32) {
    %c0_i32 = arith.constant 0 : i32
    %c0_i32_0 = arith.constant 0 : i32
    %c0_i32_1 = arith.constant 0 : i32
    return %c0_i32, %c0_i32_0 : i32, i32
  }
  func.func @transform_8(%arg0: i32) -> (i32, i32) {
    %c0_i32 = arith.constant 0 : i32
    %c0_i32_0 = arith.constant 0 : i32
    %c0_i32_1 = arith.constant 0 : i32
    return %c0_i32, %c0_i32_0 : i32, i32
  }
  func.func @transform_9(%arg0: i32) -> (i32, i32) {
    %c0_i32 = arith.constant 0 : i32
    %c0_i32_0 = arith.constant 0 : i32
    %c0_i32_1 = arith.constant 0 : i32
    return %c0_i32, %c0_i32_0 : i32, i32
  }
  func.func @transform_10(%arg0: i32) -> (i32, i32) {
    %c0_i32 = arith.constant 0 : i32
    %c0_i32_0 = arith.constant 0 : i32
    %c0_i32_1 = arith.constant 0 : i32
    return %c0_i32, %c0_i32_0 : i32, i32
  }
  func.func @transform_11(%arg0: i32) -> (i32, i32) {
    %c0_i32 = arith.constant 0 : i32
    %c0_i32_0 = arith.constant 0 : i32
    %c0_i32_1 = arith.constant 0 : i32
    return %c0_i32, %c0_i32_0 : i32, i32
  }
  func.func @transform_12(%arg0: i32) -> (i32, i32) {
    %c0_i32 = arith.constant 0 : i32
    %c0_i32_0 = arith.constant 0 : i32
    %c0_i32_1 = arith.constant 0 : i32
    return %c0_i32, %c0_i32_0 : i32, i32
  }
  func.func @transform_13(%arg0: i32) -> (i32, i32) {
    %c0_i32 = arith.constant 0 : i32
    %c0_i32_0 = arith.constant 0 : i32
    %c0_i32_1 = arith.constant 0 : i32
    return %c0_i32, %c0_i32_0 : i32, i32
  }
  func.func @transform_14(%arg0: i32) -> (i32, i32) {
    %c0_i32 = arith.constant 0 : i32
    %c0_i32_0 = arith.constant 0 : i32
    %c0_i32_1 = arith.constant 0 : i32
    return %c0_i32, %c0_i32_0 : i32, i32
  }
  func.func @transform_15(%arg0: i32) -> (i32, i32) {
    %c0_i32 = arith.constant 0 : i32
    %c0_i32_0 = arith.constant 0 : i32
    %c0_i32_1 = arith.constant 0 : i32
    return %c0_i32, %c0_i32_0 : i32, i32
  }
}

</mosaic_0001>

<llo_original>
// kernel: tpu_custom_call.1
$region0: #{tpu_custom_call.1}
  #allocation0 [shape = 'u32[]', space=smem, size = 0x4, offset = 0x4, fixed_abs, tag = 'smem constant byte address 0x4 - core index']
  #allocation1 [shape = 'u32[144,128]{1,0:T(1,128)}', space=vmem, size = 0x12000, scoped, tag = 'internal scratch']
  #allocation2 [shape = 'f32[1,1]{1,0:T(1,128)S(1)}', space=vmem, size = 0x200, scoped, tag = 'scoped memory for tpu_custom_call.1']
  %s0 = inlined_call_operand.vmem [shape: f32[64,16], index: 0, kind: input, shape index: {}]
  %s1 = inlined_call_operand.vmem [shape: f32[64,8], index: 1, kind: input, shape index: {}]
  %s2 = inlined_call_operand.vmem [shape: f32[16,32], index: 2, kind: input, shape index: {}]
  %s3 = inlined_call_operand.vmem [shape: f32[1,32], index: 3, kind: input, shape index: {}]
  %s4 = inlined_call_operand.vmem [shape: f32[32,32], index: 4, kind: input, shape index: {}]
  %s5 = inlined_call_operand.vmem [shape: f32[8,32], index: 5, kind: input, shape index: {}]
  %s6 = inlined_call_operand.vmem [shape: f32[1,32], index: 6, kind: input, shape index: {}]
  %s7 = inlined_call_operand.vmem [shape: f32[1,32], index: 7, kind: input, shape index: {}]
  %s8 = inlined_call_operand.vmem [shape: f32[1,32], index: 8, kind: input, shape index: {}]
  %s9 = inlined_call_operand.vmem [shape: f32[32,32], index: 9, kind: input, shape index: {}]
  %s10 = inlined_call_operand.vmem [shape: f32[1,32], index: 10, kind: input, shape index: {}]
  %s11 = inlined_call_operand.vmem [shape: f32[1,32], index: 11, kind: input, shape index: {}]
  %s12 = inlined_call_operand.vmem [shape: f32[1,32], index: 12, kind: input, shape index: {}]
  %s13 = inlined_call_operand.vmem [shape: f32[1,32], index: 13, kind: input, shape index: {}]
  %s14 = inlined_call_operand.<no memory space> [shape: f32[1,1], index: 14, kind: input, shape index: {}]
  %s15 = inlined_call_operand.vmem [shape: f32[64,1], index: 15, kind: output, shape index: {}]
  %s16 = sld [smem:[#allocation0]]
  $region70: #{tpu_custom_call.1} parent=0
    _
  %s18 = ssub.s32 1, %s16
  %s19 = scalar_select 0, %s18, %s16
  %v20 = vstv %s14
  %21 = vst [vmem:[#allocation2] sm:$0x1] %v20
  // Predicated region
  $region2: #{tpu_custom_call.1} parent=0 // pred_check
    _
  $region3: #{tpu_custom_call.1} parent=0 // pred_check_branch
    %23 = sbr.rel (0) target = $region5
  $region4: #{tpu_custom_call.1} parent=0 // pred_region
    _
  $region5: #{tpu_custom_call.1} parent=0 // pred_fallthru
    _
  // Predicated region
  $region6: #{tpu_custom_call.1} parent=0 // pred_check
    _
  $region7: #{tpu_custom_call.1} parent=0 // pred_check_branch
    %25 = sbr.rel (0) target = $region9
  $region8: #{tpu_custom_call.1} parent=0 // pred_region
    _
  $region9: #{tpu_custom_call.1} parent=0 // pred_fallthru
    _
  // Predicated region
  $region10: #{tpu_custom_call.1} parent=0 // pred_check
    _
  $region11: #{tpu_custom_call.1} parent=0 // pred_check_branch
    %27 = sbr.rel (0) target = $region13
  $region12: #{tpu_custom_call.1} parent=0 // pred_region
    _
  $region13: #{tpu_custom_call.1} parent=0 // pred_fallthru
    _
  // Predicated region
  $region14: #{tpu_custom_call.1} parent=0 // pred_check
    _
  $region15: #{tpu_custom_call.1} parent=0 // pred_check_branch
    %29 = sbr.rel (0) target = $region17
  $region16: #{tpu_custom_call.1} parent=0 // pred_region
    _
  $region17: #{tpu_custom_call.1} parent=0 // pred_fallthru
    _
  // Predicated region
  $region18: #{tpu_custom_call.1} parent=0 // pred_check
    _
  $region19: #{tpu_custom_call.1} parent=0 // pred_check_branch
    %31 = sbr.rel (0) target = $region21
  $region20: #{tpu_custom_call.1} parent=0 // pred_region
    _
  $region21: #{tpu_custom_call.1} parent=0 // pred_fallthru
    _
  // Predicated region
  $region22: #{tpu_custom_call.1} parent=0 // pred_check
    _
  $region23: #{tpu_custom_call.1} parent=0 // pred_check_branch
    %33 = sbr.rel (0) target = $region25
  $region24: #{tpu_custom_call.1} parent=0 // pred_region
    _
  $region25: #{tpu_custom_call.1} parent=0 // pred_fallthru
    _
  // Predicated region
  $region26: #{tpu_custom_call.1} parent=0 // pred_check
    _
  $region27: #{tpu_custom_call.1} parent=0 // pred_check_branch
    %35 = sbr.rel (0) target = $region29
  $region28: #{tpu_custom_call.1} parent=0 // pred_region
    _
  $region29: #{tpu_custom_call.1} parent=0 // pred_fallthru
    _
  // Predicated region
  $region30: #{tpu_custom_call.1} parent=0 // pred_check
    _
  $region31: #{tpu_custom_call.1} parent=0 // pred_check_branch
    %37 = sbr.rel (0) target = $region33
  $region32: #{tpu_custom_call.1} parent=0 // pred_region
    _
  $region33: #{tpu_custom_call.1} parent=0 // pred_fallthru
    _
  // Predicated region
  $region34: #{tpu_custom_call.1} parent=0 // pred_check
    _
  $region35: #{tpu_custom_call.1} parent=0 // pred_check_branch
    %39 = sbr.rel (0) target = $region37
  $region36: #{tpu_custom_call.1} parent=0 // pred_region
    _
  $region37: #{tpu_custom_call.1} parent=0 // pred_fallthru
    _
  // Predicated region
  $region38: #{tpu_custom_call.1} parent=0 // pred_check
    _
  $region39: #{tpu_custom_call.1} parent=0 // pred_check_branch
    %41 = sbr.rel (0) target = $region41
  $region40: #{tpu_custom_call.1} parent=0 // pred_region
    _
  $region41: #{tpu_custom_call.1} parent=0 // pred_fallthru
    _
  // Predicated region
  $region42: #{tpu_custom_call.1} parent=0 // pred_check
    _
  $region43: #{tpu_custom_call.1} parent=0 // pred_check_branch
    %43 = sbr.rel (0) target = $region45
  $region44: #{tpu_custom_call.1} parent=0 // pred_region
    _
  $region45: #{tpu_custom_call.1} parent=0 // pred_fallthru
    _
  // Predicated region
  $region46: #{tpu_custom_call.1} parent=0 // pred_check
    _
  $region47: #{tpu_custom_call.1} parent=0 // pred_check_branch
    %45 = sbr.rel (0) target = $region49
  $region48: #{tpu_custom_call.1} parent=0 // pred_region
    _
  $region49: #{tpu_custom_call.1} parent=0 // pred_fallthru
    _
  // Predicated region
  $region50: #{tpu_custom_call.1} parent=0 // pred_check
    _
  $region51: #{tpu_custom_call.1} parent=0 // pred_check_branch
    %47 = sbr.rel (0) target = $region53
  $region52: #{tpu_custom_call.1} parent=0 // pred_region
    _
  $region53: #{tpu_custom_call.1} parent=0 // pred_fallthru
    _
  // Predicated region
  $region54: #{tpu_custom_call.1} parent=0 // pred_check
    _
  $region55: #{tpu_custom_call.1} parent=0 // pred_check_branch
    %49 = sbr.rel (0) target = $region57
  $region56: #{tpu_custom_call.1} parent=0 // pred_region
    _
  $region57: #{tpu_custom_call.1} parent=0 // pred_fallthru
    _
  // Predicated region
  $region58: #{tpu_custom_call.1} parent=0 // pred_check
    _
  $region59: #{tpu_custom_call.1} parent=0 // pred_check_branch
    %51 = sbr.rel (0) target = $region61
  $region60: #{tpu_custom_call.1} parent=0 // pred_region
    _
  $region61: #{tpu_custom_call.1} parent=0 // pred_fallthru
    _
  %v52 = vld [vmem:[%s0] sm:$0xff]
  %v53 = vld [vmem:[%s0 + $0x8] sm:$0xff]
  %v54 = vld [vmem:[%s0 + $0x10] sm:$0xff]
  %v55 = vld [vmem:[%s0 + $0x18] sm:$0xff]
  %v56 = vld [vmem:[%s0 + $0x20] sm:$0xff]
  %v57 = vld [vmem:[%s0 + $0x28] sm:$0xff]
  %v58 = vld [vmem:[%s0 + $0x30] sm:$0xff]
  %v59 = vld [vmem:[%s0 + $0x38] sm:$0xff]
  %v60 = vld [vmem:[%s1] sm:$0xff]
  %v61 = vld [vmem:[%s1 + $0x8] sm:$0xff]
  %v62 = vld [vmem:[%s1 + $0x10] sm:$0xff]
  %v63 = vld [vmem:[%s1 + $0x18] sm:$0xff]
  %v64 = vld [vmem:[%s1 + $0x20] sm:$0xff]
  %v65 = vld [vmem:[%s1 + $0x28] sm:$0xff]
  %v66 = vld [vmem:[%s1 + $0x30] sm:$0xff]
  %v67 = vld [vmem:[%s1 + $0x38] sm:$0xff]
  %v68 = vld [vmem:[%s2] sm:$0xff]
  %v69 = vld [vmem:[%s2 + $0x8] sm:$0xff]
  %v70 = vld [vmem:[%s3] sm:$0x1]
  %v71 = vld [vmem:[%s4] sm:$0xff]
  %v72 = vld [vmem:[%s4 + $0x8] sm:$0xff]
  %v73 = vld [vmem:[%s4 + $0x10] sm:$0xff]
  %v74 = vld [vmem:[%s4 + $0x18] sm:$0xff]
  %v75 = vld [vmem:[%s5] sm:$0xff]
  %v76 = vld [vmem:[%s6] sm:$0x1]
  %v78 = vlaneseq
  %v79 = vshrl.u32 %v78, 7
  %v80 = vsub.s32 0, %v79
  %v81 = vrot.slane %v70, %v80
  %vm83 = vcmask 130048
  %v85 = vsel %vm83, %v52, 0
  %v88 = vsel %vm83, %v53, 0
  %v91 = vsel %vm83, %v54, 0
  %v94 = vsel %vm83, %v55, 0
  %v97 = vsel %vm83, %v56, 0
  %v100 = vsel %vm83, %v57, 0
  %v103 = vsel %vm83, %v58, 0
  %v106 = vsel %vm83, %v59, 0
  %108 = vmatprep.subr.mxu0 0.0
  %109 = vmatpush1.msra.mxu0 %v68
  %110 = vmatprep.subr.mxu0 0.0
  %111 = vmatpush1.msra.mxu0 %v69
  %112 = vmatprep.subr.mxu0 0.0
  %113 = vmatpush1.msra.mxu0 0.0
  %114 = vmatprep.subr.mxu0 0.0
  %115 = vmatpush1.msra.mxu0 0.0
  %116 = vmatprep.subr.mxu0 0.0
  %117 = vmatpush1.msra.mxu0 0.0
  %118 = vmatprep.subr.mxu0 0.0
  %119 = vmatpush1.msra.mxu0 0.0
  %120 = vmatprep.subr.mxu0 0.0
  %121 = vmatpush1.msra.mxu0 0.0
  %122 = vmatprep.subr.mxu0 0.0
  %123 = vmatpush1.msra.mxu0 0.0
  %124 = vmatprep.subr.mxu0 0.0
  %125 = vmatpush1.msra.mxu0 0.0
  %126 = vmatprep.subr.mxu0 0.0
  %127 = vmatpush1.msra.mxu0 0.0
  %128 = vmatprep.subr.mxu0 0.0
  %129 = vmatpush1.msra.mxu0 0.0
  %130 = vmatprep.subr.mxu0 0.0
  %131 = vmatpush1.msra.mxu0 0.0
  %132 = vmatprep.subr.mxu0 0.0
  %133 = vmatpush1.msra.mxu0 0.0
  %134 = vmatprep.subr.mxu0 0.0
  %135 = vmatpush1.msra.mxu0 0.0
  %136 = vmatprep.subr.mxu0 0.0
  %137 = vmatpush1.msra.mxu0 0.0
  %138 = vmatprep.subr.mxu0 0.0
  %139 = vmatpush1.msra.mxu0 0.0
  %140 = vmatprep.subr.mxu0 0.0
  %141 = vmatpush1.msra.mxu0 0.0
  %142 = vmatprep.subr.mxu0 0.0
  %143 = vmatpush1.msra.mxu0 0.0
  %144 = vmatprep.subr.mxu0 0.0
  %145 = vmatpush1.msra.mxu0 0.0
  %146 = vmatprep.subr.mxu0 0.0
  %147 = vmatpush1.msra.mxu0 0.0
  %148 = vmatprep.subr.mxu0 0.0
  %149 = vmatpush1.msra.mxu0 0.0
  %150 = vmatprep.subr.mxu0 0.0
  %151 = vmatpush1.msra.mxu0 0.0
  %152 = vmatprep.subr.mxu0 0.0
  %153 = vmatpush1.msra.mxu0 0.0
  %154 = vmatprep.subr.mxu0 0.0
  %155 = vmatpush1.msra.mxu0 0.0
  %156 = vmatprep.subr.mxu0 0.0
  %157 = vmatpush1.msra.mxu0 0.0
  %158 = vmatprep.subr.mxu0 0.0
  %159 = vmatpush1.msra.mxu0 0.0
  %160 = vmatprep.subr.mxu0 0.0
  %161 = vmatpush1.msra.mxu0 0.0
  %162 = vmatprep.subr.mxu0 0.0
  %163 = vmatpush1.msra.mxu0 0.0
  %164 = vmatprep.subr.mxu0 0.0
  %165 = vmatpush1.msra.mxu0 0.0
  %166 = vmatprep.subr.mxu0 0.0
  %167 = vmatpush1.msra.mxu0 0.0
  %168 = vmatprep.subr.mxu0 0.0
  %169 = vmatpush1.msra.mxu0 0.0
  %170 = vmatprep.subr.mxu0 0.0
  %171 = vmatpush1.msra.mxu0 0.0
  %172 = vmatprep.mubr.f32.mxu0 0.0
  %173 = vmatmul.mubr.f32.gmra.mrb[0].mxu0 %v85
  %v174 = vpop.f32.mrb[0].mxu0
  %v175 = vadd.f32 %v81, %v174
  %v176 = vpop.f32.mrb[0].mxu0
  %177 = vmatprep.mubr.f32.mxu0 0.0
  %178 = vmatmul.mubr.f32.gmra.mrb[0].mxu0 %v88
  %v179 = vpop.f32.mrb[0].mxu0
  %v180 = vadd.f32 %v81, %v179
  %v181 = vpop.f32.mrb[0].mxu0
  %182 = vmatprep.mubr.f32.mxu0 0.0
  %183 = vmatmul.mubr.f32.gmra.mrb[0].mxu0 %v91
  %v184 = vpop.f32.mrb[0].mxu0
  %v185 = vadd.f32 %v81, %v184
  %v186 = vpop.f32.mrb[0].mxu0
  %187 = vmatprep.mubr.f32.mxu0 0.0
  %188 = vmatmul.mubr.f32.gmra.mrb[0].mxu0 %v94
  %v189 = vpop.f32.mrb[0].mxu0
  %v190 = vadd.f32 %v81, %v189
  %v191 = vpop.f32.mrb[0].mxu0
  %192 = vmatprep.mubr.f32.mxu0 0.0
  %193 = vmatmul.mubr.f32.gmra.mrb[0].mxu0 %v97
  %v194 = vpop.f32.mrb[0].mxu0
  %v195 = vadd.f32 %v81, %v194
  %v196 = vpop.f32.mrb[0].mxu0
  %197 = vmatprep.mubr.f32.mxu0 0.0
  %198 = vmatmul.mubr.f32.gmra.mrb[0].mxu0 %v100
  %v199 = vpop.f32.mrb[0].mxu0
  %v200 = vadd.f32 %v81, %v199
  %v201 = vpop.f32.mrb[0].mxu0
  %202 = vmatprep.mubr.f32.mxu0 0.0
  %203 = vmatmul.mubr.f32.gmra.mrb[0].mxu0 %v103
  %v204 = vpop.f32.mrb[0].mxu0
  %v205 = vadd.f32 %v81, %v204
  %v206 = vpop.f32.mrb[0].mxu0
  %207 = vmatprep.mubr.f32.mxu0 0.0
  %208 = vmatmul.mubr.f32.gmra.mrb[0].mxu0 %v106
  %v209 = vpop.f32.mrb[0].mxu0
  %v210 = vadd.f32 %v81, %v209
  %v211 = vpop.f32.mrb[0].mxu0
  %212 = vdwg.mxu0
  %vm213 = vcmp.ge.f32.partialorder %v175, 0.0
  %vm214 = vcmp.ge.f32.partialorder %v180, 0.0
  %vm215 = vcmp.ge.f32.partialorder %v185, 0.0
  %vm216 = vcmp.ge.f32.partialorder %v190, 0.0
  %vm217 = vcmp.ge.f32.partialorder %v195, 0.0
  %vm218 = vcmp.ge.f32.partialorder %v200, 0.0
  %vm219 = vcmp.ge.f32.partialorder %v205, 0.0
  %vm220 = vcmp.ge.f32.partialorder %v210, 0.0
  %v221 = vmul.f32 %v175, 0.01
  %v222 = vmul.f32 %v180, 0.01
  %v223 = vmul.f32 %v185, 0.01
  %v224 = vmul.f32 %v190, 0.01
  %v225 = vmul.f32 %v195, 0.01
  %v226 = vmul.f32 %v200, 0.01
  %v227 = vmul.f32 %v205, 0.01
  %v228 = vmul.f32 %v210, 0.01
  %v229 = vsel %vm213, %v175, %v221
  %v230 = vsel %vm214, %v180, %v222
  %v231 = vsel %vm215, %v185, %v223
  %v232 = vsel %vm216, %v190, %v224
  %v233 = vsel %vm217, %v195, %v225
  %v234 = vsel %vm218, %v200, %v226
  %v235 = vsel %vm219, %v205, %v227
  %v236 = vsel %vm220, %v210, %v228
  %vm237 = vcmask 64512
  %v239 = vsel %vm237, %v60, 0
  %v242 = vsel %vm237, %v61, 0
  %v245 = vsel %vm237, %v62, 0
  %v248 = vsel %vm237, %v63, 0
  %v251 = vsel %vm237, %v64, 0
  %v254 = vsel %vm237, %v65, 0
  %v257 = vsel %vm237, %v66, 0
  %v260 = vsel %vm237, %v67, 0
  %262 = vmatprep.subr.mxu0 0.0
  %263 = vmatpush1.msra.mxu0 %v75
  %264 = vmatprep.subr.mxu0 0.0
  %265 = vmatpush1.msra.mxu0 0.0
  %266 = vmatprep.subr.mxu0 0.0
  %267 = vmatpush1.msra.mxu0 0.0
  %268 = vmatprep.subr.mxu0 0.0
  %269 = vmatpush1.msra.mxu0 0.0
  %270 = vmatprep.subr.mxu0 0.0
  %271 = vmatpush1.msra.mxu0 0.0
  %272 = vmatprep.subr.mxu0 0.0
  %273 = vmatpush1.msra.mxu0 0.0
  %274 = vmatprep.subr.mxu0 0.0
  %275 = vmatpush1.msra.mxu0 0.0
  %276 = vmatprep.subr.mxu0 0.0
  %277 = vmatpush1.msra.mxu0 0.0
  %278 = vmatprep.subr.mxu0 0.0
  %279 = vmatpush1.msra.mxu0 0.0
  %280 = vmatprep.subr.mxu0 0.0
  %281 = vmatpush1.msra.mxu0 0.0
  %282 = vmatprep.subr.mxu0 0.0
  %283 = vmatpush1.msra.mxu0 0.0
  %284 = vmatprep.subr.mxu0 0.0
  %285 = vmatpush1.msra.mxu0 0.0
  %286 = vmatprep.subr.mxu0 0.0
  %287 = vmatpush1.msra.mxu0 0.0
  %288 = vmatprep.subr.mxu0 0.0
  %289 = vmatpush1.msra.mxu0 0.0
  %290 = vmatprep.subr.mxu0 0.0
  %291 = vmatpush1.msra.mxu0 0.0
  %292 = vmatprep.subr.mxu0 0.0
  %293 = vmatpush1.msra.mxu0 0.0
  %294 = vmatprep.subr.mxu0 0.0
  %295 = vmatpush1.msra.mxu0 0.0
  %296 = vmatprep.subr.mxu0 0.0
  %297 = vmatpush1.msra.mxu0 0.0
  %298 = vmatprep.subr.mxu0 0.0
  %299 = vmatpush1.msra.mxu0 0.0
  %300 = vmatprep.subr.mxu0 0.0
  %301 = vmatpush1.msra.mxu0 0.0
  %302 = vmatprep.subr.mxu0 0.0
  %303 = vmatpush1.msra.mxu0 0.0
  %304 = vmatprep.subr.mxu0 0.0
  %305 = vmatpush1.msra.mxu0 0.0
  %306 = vmatprep.subr.mxu0 0.0
  %307 = vmatpush1.msra.mxu0 0.0
  %308 = vmatprep.subr.mxu0 0.0
  %309 = vmatpush1.msra.mxu0 0.0
  %310 = vmatprep.subr.mxu0 0.0
  %311 = vmatpush1.msra.mxu0 0.0
  %312 = vmatprep.subr.mxu0 0.0
  %313 = vmatpush1.msra.mxu0 0.0
  %314 = vmatprep.subr.mxu0 0.0
  %315 = vmatpush1.msra.mxu0 0.0
  %316 = vmatprep.subr.mxu0 0.0
  %317 = vmatpush1.msra.mxu0 0.0
  %318 = vmatprep.subr.mxu0 0.0
  %319 = vmatpush1.msra.mxu0 0.0
  %320 = vmatprep.subr.mxu0 0.0
  %321 = vmatpush1.msra.mxu0 0.0
  %322 = vmatprep.subr.mxu0 0.0
  %323 = vmatpush1.msra.mxu0 0.0
  %324 = vmatprep.subr.mxu0 0.0
  %325 = vmatpush1.msra.mxu0 0.0
  %326 = vmatprep.mubr.f32.mxu0 0.0
  %327 = vmatmul.mubr.f32.gmra.mrb[0].mxu0 %v239
  %v328 = vpop.f32.mrb[0].mxu0
  %v329 = vadd.f32 0.0, %v328
  %v330 = vpop.f32.mrb[0].mxu0
  %331 = vmatprep.mubr.f32.mxu0 0.0
  %332 = vmatmul.mubr.f32.gmra.mrb[0].mxu0 %v242
  %v333 = vpop.f32.mrb[0].mxu0
  %v334 = vadd.f32 0.0, %v333
  %v335 = vpop.f32.mrb[0].mxu0
  %336 = vmatprep.mubr.f32.mxu0 0.0
  %337 = vmatmul.mubr.f32.gmra.mrb[0].mxu0 %v245
  %v338 = vpop.f32.mrb[0].mxu0
  %v339 = vadd.f32 0.0, %v338
  %v340 = vpop.f32.mrb[0].mxu0
  %341 = vmatprep.mubr.f32.mxu0 0.0
  %342 = vmatmul.mubr.f32.gmra.mrb[0].mxu0 %v248
  %v343 = vpop.f32.mrb[0].mxu0
  %v344 = vadd.f32 0.0, %v343
  %v345 = vpop.f32.mrb[0].mxu0
  %346 = vmatprep.mubr.f32.mxu0 0.0
  %347 = vmatmul.mubr.f32.gmra.mrb[0].mxu0 %v251
  %v348 = vpop.f32.mrb[0].mxu0
  %v349 = vadd.f32 0.0, %v348
  %v350 = vpop.f32.mrb[0].mxu0
  %351 = vmatprep.mubr.f32.mxu0 0.0
  %352 = vmatmul.mubr.f32.gmra.mrb[0].mxu0 %v254
  %v353 = vpop.f32.mrb[0].mxu0
  %v354 = vadd.f32 0.0, %v353
  %v355 = vpop.f32.mrb[0].mxu0
  %356 = vmatprep.mubr.f32.mxu0 0.0
  %357 = vmatmul.mubr.f32.gmra.mrb[0].mxu0 %v257
  %v358 = vpop.f32.mrb[0].mxu0
  %v359 = vadd.f32 0.0, %v358
  %v360 = vpop.f32.mrb[0].mxu0
  %361 = vmatprep.mubr.f32.mxu0 0.0
  %362 = vmatmul.mubr.f32.gmra.mrb[0].mxu0 %v260
  %v363 = vpop.f32.mrb[0].mxu0
  %v364 = vadd.f32 0.0, %v363
  %v365 = vpop.f32.mrb[0].mxu0
  %366 = vdwg.mxu0
  %vm367 = vcmask 261120
  %v369 = vsel %vm367, %v229, 0
  %v372 = vsel %vm367, %v230, 0
  %v375 = vsel %vm367, %v231, 0
  %v378 = vsel %vm367, %v232, 0
  %v381 = vsel %vm367, %v233, 0
  %v384 = vsel %vm367, %v234, 0
  %v387 = vsel %vm367, %v235, 0
  %v390 = vsel %vm367, %v236, 0
  %392 = vmatprep.subr.mxu0 0.0
  %393 = vmatpush1.msra.mxu0 %v71
  %394 = vmatprep.subr.mxu0 0.0
  %395 = vmatpush1.msra.mxu0 %v72
  %396 = vmatprep.subr.mxu0 0.0
  %397 = vmatpush1.msra.mxu0 %v73
  %398 = vmatprep.subr.mxu0 0.0
  %399 = vmatpush1.msra.mxu0 %v74
  %400 = vmatprep.subr.mxu0 0.0
  %401 = vmatpush1.msra.mxu0 0.0
  %402 = vmatprep.subr.mxu0 0.0
  %403 = vmatpush1.msra.mxu0 0.0
  %404 = vmatprep.subr.mxu0 0.0
  %405 = vmatpush1.msra.mxu0 0.0
  %406 = vmatprep.subr.mxu0 0.0
  %407 = vmatpush1.msra.mxu0 0.0
  %408 = vmatprep.subr.mxu0 0.0
  %409 = vmatpush1.msra.mxu0 0.0
  %410 = vmatprep.subr.mxu0 0.0
  %411 = vmatpush1.msra.mxu0 0.0
  %412 = vmatprep.subr.mxu0 0.0
  %413 = vmatpush1.msra.mxu0 0.0
  %414 = vmatprep.subr.mxu0 0.0
  %415 = vmatpush1.msra.mxu0 0.0
  %416 = vmatprep.subr.mxu0 0.0
  %417 = vmatpush1.msra.mxu0 0.0
  %418 = vmatprep.subr.mxu0 0.0
  %419 = vmatpush1.msra.mxu0 0.0
  %420 = vmatprep.subr.mxu0 0.0
  %421 = vmatpush1.msra.mxu0 0.0
  %422 = vmatprep.subr.mxu0 0.0
  %423 = vmatpush1.msra.mxu0 0.0
  %424 = vmatprep.subr.mxu0 0.0
  %425 = vmatpush1.msra.mxu0 0.0
  %426 = vmatprep.subr.mxu0 0.0
  %427 = vmatpush1.msra.mxu0 0.0
  %428 = vmatprep.subr.mxu0 0.0
  %429 = vmatpush1.msra.mxu0 0.0
  %430 = vmatprep.subr.mxu0 0.0
  %431 = vmatpush1.msra.mxu0 0.0
  %432 = vmatprep.subr.mxu0 0.0
  %433 = vmatpush1.msra.mxu0 0.0
  %434 = vmatprep.subr.mxu0 0.0
  %435 = vmatpush1.msra.mxu0 0.0
  %436 = vmatprep.subr.mxu0 0.0
  %437 = vmatpush1.msra.mxu0 0.0
  %438 = vmatprep.subr.mxu0 0.0
  %439 = vmatpush1.msra.mxu0 0.0
  %440 = vmatprep.subr.mxu0 0.0
  %441 = vmatpush1.msra.mxu0 0.0
  %442 = vmatprep.subr.mxu0 0.0
  %443 = vmatpush1.msra.mxu0 0.0
  %444 = vmatprep.subr.mxu0 0.0
  %445 = vmatpush1.msra.mxu0 0.0
  %446 = vmatprep.subr.mxu0 0.0
  %447 = vmatpush1.msra.mxu0 0.0
  %448 = vmatprep.subr.mxu0 0.0
  %449 = vmatpush1.msra.mxu0 0.0
  %450 = vmatprep.subr.mxu0 0.0
  %451 = vmatpush1.msra.mxu0 0.0
  %452 = vmatprep.subr.mxu0 0.0
  %453 = vmatpush1.msra.mxu0 0.0
  %454 = vmatprep.subr.mxu0 0.0
  %455 = vmatpush1.msra.mxu0 0.0
  %456 = vmatprep.mubr.f32.mxu0 0.0
  %457 = vmatmul.mubr.f32.gmra.mrb[0].mxu0 %v369
  %v458 = vpop.f32.mrb[0].mxu0
  %v459 = vadd.f32 %v329, %v458
  %v460 = vpop.f32.mrb[0].mxu0
  %461 = vmatprep.mubr.f32.mxu0 0.0
  %462 = vmatmul.mubr.f32.gmra.mrb[0].mxu0 %v372
  %v463 = vpop.f32.mrb[0].mxu0
  %v464 = vadd.f32 %v334, %v463
  %v465 = vpop.f32.mrb[0].mxu0
  %466 = vmatprep.mubr.f32.mxu0 0.0
  %467 = vmatmul.mubr.f32.gmra.mrb[0].mxu0 %v375
  %v468 = vpop.f32.mrb[0].mxu0
  %v469 = vadd.f32 %v339, %v468
  %v470 = vpop.f32.mrb[0].mxu0
  %471 = vmatprep.mubr.f32.mxu0 0.0
  %472 = vmatmul.mubr.f32.gmra.mrb[0].mxu0 %v378
  %v473 = vpop.f32.mrb[0].mxu0
  %v474 = vadd.f32 %v344, %v473
  %v475 = vpop.f32.mrb[0].mxu0
  %476 = vmatprep.mubr.f32.mxu0 0.0
  %477 = vmatmul.mubr.f32.gmra.mrb[0].mxu0 %v381
  %v478 = vpop.f32.mrb[0].mxu0
  %v479 = vadd.f32 %v349, %v478
  %v480 = vpop.f32.mrb[0].mxu0
  %481 = vmatprep.mubr.f32.mxu0 0.0
  %482 = vmatmul.mubr.f32.gmra.mrb[0].mxu0 %v384
  %v483 = vpop.f32.mrb[0].mxu0
  %v484 = vadd.f32 %v354, %v483
  %v485 = vpop.f32.mrb[0].mxu0
  %486 = vmatprep.mubr.f32.mxu0 0.0
  %487 = vmatmul.mubr.f32.gmra.mrb[0].mxu0 %v387
  %v488 = vpop.f32.mrb[0].mxu0
  %v489 = vadd.f32 %v359, %v488
  %v490 = vpop.f32.mrb[0].mxu0
  %491 = vmatprep.mubr.f32.mxu0 0.0
  %492 = vmatmul.mubr.f32.gmra.mrb[0].mxu0 %v390
  %v493 = vpop.f32.mrb[0].mxu0
  %v494 = vadd.f32 %v364, %v493
  %v495 = vpop.f32.mrb[0].mxu0
  %496 = vdwg.mxu0
  %v498 = vlaneseq
  %v499 = vshrl.u32 %v498, 7
  %v500 = vsub.s32 0, %v499
  %v501 = vrot.slane %v76, %v500
  %v503 = vadd.f32 %v459, %v501
  %v504 = vadd.f32 %v464, %v501
  %v505 = vadd.f32 %v469, %v501
  %v506 = vadd.f32 %v474, %v501
  %v507 = vadd.f32 %v479, %v501
  %v508 = vadd.f32 %v484, %v501
  %v509 = vadd.f32 %v489, %v501
  %v510 = vadd.f32 %v494, %v501
  %v511 = vsel %vm367, %v503, 0.0
  %v512 = vsel %vm367, %v504, 0.0
  %v513 = vadd.f32 %v511, %v512
  %v514 = vsel %vm367, %v505, 0.0
  %v515 = vadd.f32 %v513, %v514
  %v516 = vsel %vm367, %v506, 0.0
  %v517 = vadd.f32 %v515, %v516
  %v518 = vsel %vm367, %v507, 0.0
  %v519 = vadd.f32 %v517, %v518
  %v520 = vsel %vm367, %v508, 0.0
  %v521 = vadd.f32 %v519, %v520
  %v522 = vsel %vm367, %v509, 0.0
  %v523 = vadd.f32 %v521, %v522
  %v524 = vsel %vm367, %v510, 0.0
  %v525 = vadd.f32 %v523, %v524
  %v526 = vrot.slane %v525, 4
  %v527 = vadd.f32 %v525, %v526
  %v528 = vrot.slane %v527, 2
  %v529 = vadd.f32 %v527, %v528
  %v530 = vrot.slane %v529, 1
  %v531 = vadd.f32 %v529, %v530
  %v532 = vmul.f32 %v531, 0.015625
  %v533 = vmul.f32 %v503, %v503
  %v534 = vmul.f32 %v504, %v504
  %v535 = vmul.f32 %v505, %v505
  %v536 = vmul.f32 %v506, %v506
  %v537 = vmul.f32 %v507, %v507
  %v538 = vmul.f32 %v508, %v508
  %v539 = vmul.f32 %v509, %v509
  %v540 = vmul.f32 %v510, %v510
  %v541 = vsel %vm367, %v533, 0.0
  %v542 = vsel %vm367, %v534, 0.0
  %v543 = vadd.f32 %v541, %v542
  %v544 = vsel %vm367, %v535, 0.0
  %v545 = vadd.f32 %v543, %v544
  %v546 = vsel %vm367, %v536, 0.0
  %v547 = vadd.f32 %v545, %v546
  %v548 = vsel %vm367, %v537, 0.0
  %v549 = vadd.f32 %v547, %v548
  %v550 = vsel %vm367, %v538, 0.0
  %v551 = vadd.f32 %v549, %v550
  %v552 = vsel %vm367, %v539, 0.0
  %v553 = vadd.f32 %v551, %v552
  %v554 = vsel %vm367, %v540, 0.0
  %v555 = vadd.f32 %v553, %v554
  %v556 = vrot.slane %v555, 4
  %v557 = vadd.f32 %v555, %v556
  %v558 = vrot.slane %v557, 2
  %v559 = vadd.f32 %v557, %v558
  %v560 = vrot.slane %v559, 1
  %v561 = vadd.f32 %v559, %v560
  %v562 = vmul.f32 %v561, 0.015625
  %v563 = vmul.f32 %v532, %v532
  %v564 = vsub.f32 %v562, %v563
  %v565 = vld [vmem:[%s7] sm:$0x1]
  %v566 = vadd.f32 %v564, 1e-05
  %v567 = vrsqrt.pop %v566
  %v568 = vmul.f32 %v565, %v567
  %v570 = vlaneseq
  %v571 = vshrl.u32 %v570, 7
  %v572 = vsub.s32 0, %v571
  %v573 = vrot.slane %v568, %v572
  %v575 = vmul.f32 %v503, %v573
  %v576 = vmul.f32 %v504, %v573
  %v577 = vmul.f32 %v505, %v573
  %v578 = vmul.f32 %v506, %v573
  %v579 = vmul.f32 %v507, %v573
  %v580 = vmul.f32 %v508, %v573
  %v581 = vmul.f32 %v509, %v573
  %v582 = vmul.f32 %v510, %v573
  %v583 = vld [vmem:[%s8] sm:$0x1]
  %v584 = vmul.f32 %v532, %v568
  %v585 = vsub.f32 %v583, %v584
  %v587 = vlaneseq
  %v588 = vshrl.u32 %v587, 7
  %v589 = vsub.s32 0, %v588
  %v590 = vrot.slane %v585, %v589
  %v592 = vadd.f32 %v575, %v590
  %v593 = vadd.f32 %v576, %v590
  %v594 = vadd.f32 %v577, %v590
  %v595 = vadd.f32 %v578, %v590
  %v596 = vadd.f32 %v579, %v590
  %v597 = vadd.f32 %v580, %v590
  %v598 = vadd.f32 %v581, %v590
  %v599 = vadd.f32 %v582, %v590
  %vm600 = vcmp.ge.f32.partialorder %v592, 0.0
  %vm601 = vcmp.ge.f32.partialorder %v593, 0.0
  %vm602 = vcmp.ge.f32.partialorder %v594, 0.0
  %vm603 = vcmp.ge.f32.partialorder %v595, 0.0
  %vm604 = vcmp.ge.f32.partialorder %v596, 0.0
  %vm605 = vcmp.ge.f32.partialorder %v597, 0.0
  %vm606 = vcmp.ge.f32.partialorder %v598, 0.0
  %vm607 = vcmp.ge.f32.partialorder %v599, 0.0
  %v608 = vmul.f32 %v592, 0.01
  %v609 = vmul.f32 %v593, 0.01
  %v610 = vmul.f32 %v594, 0.01
  %v611 = vmul.f32 %v595, 0.01
  %v612 = vmul.f32 %v596, 0.01
  %v613 = vmul.f32 %v597, 0.01
  %v614 = vmul.f32 %v598, 0.01
  %v615 = vmul.f32 %v599, 0.01
  %v616 = vsel %vm600, %v592, %v608
  %v617 = vsel %vm601, %v593, %v609
  %v618 = vsel %vm602, %v594, %v610
  %v619 = vsel %vm603, %v595, %v611
  %v620 = vsel %vm604, %v596, %v612
  %v621 = vsel %vm605, %v597, %v613
  %v622 = vsel %vm606, %v598, %v614
  %v623 = vsel %vm607, %v599, %v615
  %v624 = vld [vmem:[%s9] sm:$0xff]
  %v625 = vld [vmem:[%s9 + $0x8] sm:$0xff]
  %v626 = vld [vmem:[%s9 + $0x10] sm:$0xff]
  %v627 = vld [vmem:[%s9 + $0x18] sm:$0xff]
  %v628 = vld [vmem:[%s10] sm:$0x1]
  %v630 = vlaneseq
  %v631 = vshrl.u32 %v630, 7
  %v632 = vsub.s32 0, %v631
  %v633 = vrot.slane %v628, %v632
  %v636 = vsel %vm367, %v616, 0
  %v639 = vsel %vm367, %v617, 0
  %v642 = vsel %vm367, %v618, 0
  %v645 = vsel %vm367, %v619, 0
  %v648 = vsel %vm367, %v620, 0
  %v651 = vsel %vm367, %v621, 0
  %v654 = vsel %vm367, %v622, 0
  %v657 = vsel %vm367, %v623, 0
  %659 = vmatprep.subr.mxu0 0.0
  %660 = vmatpush1.msra.mxu0 %v624
  %661 = vmatprep.subr.mxu0 0.0
  %662 = vmatpush1.msra.mxu0 %v625
  %663 = vmatprep.subr.mxu0 0.0
  %664 = vmatpush1.msra.mxu0 %v626
  %665 = vmatprep.subr.mxu0 0.0
  %666 = vmatpush1.msra.mxu0 %v627
  %667 = vmatprep.subr.mxu0 0.0
  %668 = vmatpush1.msra.mxu0 0.0
  %669 = vmatprep.subr.mxu0 0.0
  %670 = vmatpush1.msra.mxu0 0.0
  %671 = vmatprep.subr.mxu0 0.0
  %672 = vmatpush1.msra.mxu0 0.0
  %673 = vmatprep.subr.mxu0 0.0
  %674 = vmatpush1.msra.mxu0 0.0
  %675 = vmatprep.subr.mxu0 0.0
  %676 = vmatpush1.msra.mxu0 0.0
  %677 = vmatprep.subr.mxu0 0.0
  %678 = vmatpush1.msra.mxu0 0.0
  %679 = vmatprep.subr.mxu0 0.0
  %680 = vmatpush1.msra.mxu0 0.0
  %681 = vmatprep.subr.mxu0 0.0
  %682 = vmatpush1.msra.mxu0 0.0
  %683 = vmatprep.subr.mxu0 0.0
  %684 = vmatpush1.msra.mxu0 0.0
  %685 = vmatprep.subr.mxu0 0.0
  %686 = vmatpush1.msra.mxu0 0.0
  %687 = vmatprep.subr.mxu0 0.0
  %688 = vmatpush1.msra.mxu0 0.0
  %689 = vmatprep.subr.mxu0 0.0
  %690 = vmatpush1.msra.mxu0 0.0
  %691 = vmatprep.subr.mxu0 0.0
  %692 = vmatpush1.msra.mxu0 0.0
  %693 = vmatprep.subr.mxu0 0.0
  %694 = vmatpush1.msra.mxu0 0.0
  %695 = vmatprep.subr.mxu0 0.0
  %696 = vmatpush1.msra.mxu0 0.0
  %697 = vmatprep.subr.mxu0 0.0
  %698 = vmatpush1.msra.mxu0 0.0
  %699 = vmatprep.subr.mxu0 0.0
  %700 = vmatpush1.msra.mxu0 0.0
  %701 = vmatprep.subr.mxu0 0.0
  %702 = vmatpush1.msra.mxu0 0.0
  %703 = vmatprep.subr.mxu0 0.0
  %704 = vmatpush1.msra.mxu0 0.0
  %705 = vmatprep.subr.mxu0 0.0
  %706 = vmatpush1.msra.mxu0 0.0
  %707 = vmatprep.subr.mxu0 0.0
  %708 = vmatpush1.msra.mxu0 0.0
  %709 = vmatprep.subr.mxu0 0.0
  %710 = vmatpush1.msra.mxu0 0.0
  %711 = vmatprep.subr.mxu0 0.0
  %712 = vmatpush1.msra.mxu0 0.0
  %713 = vmatprep.subr.mxu0 0.0
  %714 = vmatpush1.msra.mxu0 0.0
  %715 = vmatprep.subr.mxu0 0.0
  %716 = vmatpush1.msra.mxu0 0.0
  %717 = vmatprep.subr.mxu0 0.0
  %718 = vmatpush1.msra.mxu0 0.0
  %719 = vmatprep.subr.mxu0 0.0
  %720 = vmatpush1.msra.mxu0 0.0
  %721 = vmatprep.subr.mxu0 0.0
  %722 = vmatpush1.msra.mxu0 0.0
  %723 = vmatprep.mubr.f32.mxu0 0.0
  %724 = vmatmul.mubr.f32.gmra.mrb[0].mxu0 %v636
  %v725 = vpop.f32.mrb[0].mxu0
  %v726 = vadd.f32 %v633, %v725
  %v727 = vpop.f32.mrb[0].mxu0
  %728 = vmatprep.mubr.f32.mxu0 0.0
  %729 = vmatmul.mubr.f32.gmra.mrb[0].mxu0 %v639
  %v730 = vpop.f32.mrb[0].mxu0
  %v731 = vadd.f32 %v633, %v730
  %v732 = vpop.f32.mrb[0].mxu0
  %733 = vmatprep.mubr.f32.mxu0 0.0
  %734 = vmatmul.mubr.f32.gmra.mrb[0].mxu0 %v642
  %v735 = vpop.f32.mrb[0].mxu0
  %v736 = vadd.f32 %v633, %v735
  %v737 = vpop.f32.mrb[0].mxu0
  %738 = vmatprep.mubr.f32.mxu0 0.0
  %739 = vmatmul.mubr.f32.gmra.mrb[0].mxu0 %v645
  %v740 = vpop.f32.mrb[0].mxu0
  %v741 = vadd.f32 %v633, %v740
  %v742 = vpop.f32.mrb[0].mxu0
  %743 = vmatprep.mubr.f32.mxu0 0.0
  %744 = vmatmul.mubr.f32.gmra.mrb[0].mxu0 %v648
  %v745 = vpop.f32.mrb[0].mxu0
  %v746 = vadd.f32 %v633, %v745
  %v747 = vpop.f32.mrb[0].mxu0
  %748 = vmatprep.mubr.f32.mxu0 0.0
  %749 = vmatmul.mubr.f32.gmra.mrb[0].mxu0 %v651
  %v750 = vpop.f32.mrb[0].mxu0
  %v751 = vadd.f32 %v633, %v750
  %v752 = vpop.f32.mrb[0].mxu0
  %753 = vmatprep.mubr.f32.mxu0 0.0
  %754 = vmatmul.mubr.f32.gmra.mrb[0].mxu0 %v654
  %v755 = vpop.f32.mrb[0].mxu0
  %v756 = vadd.f32 %v633, %v755
  %v757 = vpop.f32.mrb[0].mxu0
  %758 = vmatprep.mubr.f32.mxu0 0.0
  %759 = vmatmul.mubr.f32.gmra.mrb[0].mxu0 %v657
  %v760 = vpop.f32.mrb[0].mxu0
  %v761 = vadd.f32 %v633, %v760
  %v762 = vpop.f32.mrb[0].mxu0
  %763 = vdwg.mxu0
  %v764 = vsel %vm367, %v726, 0.0
  %v765 = vsel %vm367, %v731, 0.0
  %v766 = vadd.f32 %v764, %v765
  %v767 = vsel %vm367, %v736, 0.0
  %v768 = vadd.f32 %v766, %v767
  %v769 = vsel %vm367, %v741, 0.0
  %v770 = vadd.f32 %v768, %v769
  %v771 = vsel %vm367, %v746, 0.0
  %v772 = vadd.f32 %v770, %v771
  %v773 = vsel %vm367, %v751, 0.0
  %v774 = vadd.f32 %v772, %v773
  %v775 = vsel %vm367, %v756, 0.0
  %v776 = vadd.f32 %v774, %v775
  %v777 = vsel %vm367, %v761, 0.0
  %v778 = vadd.f32 %v776, %v777
  %v779 = vrot.slane %v778, 4
  %v780 = vadd.f32 %v778, %v779
  %v781 = vrot.slane %v780, 2
  %v782 = vadd.f32 %v780, %v781
  %v783 = vrot.slane %v782, 1
  %v784 = vadd.f32 %v782, %v783
  %v785 = vmul.f32 %v784, 0.015625
  %v786 = vmul.f32 %v726, %v726
  %v787 = vmul.f32 %v731, %v731
  %v788 = vmul.f32 %v736, %v736
  %v789 = vmul.f32 %v741, %v741
  %v790 = vmul.f32 %v746, %v746
  %v791 = vmul.f32 %v751, %v751
  %v792 = vmul.f32 %v756, %v756
  %v793 = vmul.f32 %v761, %v761
  %v794 = vsel %vm367, %v786, 0.0
  %v795 = vsel %vm367, %v787, 0.0
  %v796 = vadd.f32 %v794, %v795
  %v797 = vsel %vm367, %v788, 0.0
  %v798 = vadd.f32 %v796, %v797
  %v799 = vsel %vm367, %v789, 0.0
  %v800 = vadd.f32 %v798, %v799
  %v801 = vsel %vm367, %v790, 0.0
  %v802 = vadd.f32 %v800, %v801
  %v803 = vsel %vm367, %v791, 0.0
  %v804 = vadd.f32 %v802, %v803
  %v805 = vsel %vm367, %v792, 0.0
  %v806 = vadd.f32 %v804, %v805
  %v807 = vsel %vm367, %v793, 0.0
  %v808 = vadd.f32 %v806, %v807
  %v809 = vrot.slane %v808, 4
  %v810 = vadd.f32 %v808, %v809
  %v811 = vrot.slane %v810, 2
  %v812 = vadd.f32 %v810, %v811
  %v813 = vrot.slane %v812, 1
  %v814 = vadd.f32 %v812, %v813
  %v815 = vmul.f32 %v814, 0.015625
  %v816 = vmul.f32 %v785, %v785
  %v817 = vsub.f32 %v815, %v816
  %v818 = vld [vmem:[%s11] sm:$0x1]
  %v819 = vadd.f32 %v817, 1e-05
  %v820 = vrsqrt.pop %v819
  %v821 = vmul.f32 %v818, %v820
  %v823 = vlaneseq
  %v824 = vshrl.u32 %v823, 7
  %v825 = vsub.s32 0, %v824
  %v826 = vrot.slane %v821, %v825
  %v828 = vmul.f32 %v726, %v826
  %v829 = vmul.f32 %v731, %v826
  %v830 = vmul.f32 %v736, %v826
  %v831 = vmul.f32 %v741, %v826
  %v832 = vmul.f32 %v746, %v826
  %v833 = vmul.f32 %v751, %v826
  %v834 = vmul.f32 %v756, %v826
  %v835 = vmul.f32 %v761, %v826
  %v836 = vld [vmem:[%s12] sm:$0x1]
  %v837 = vmul.f32 %v785, %v821
  %v838 = vsub.f32 %v836, %v837
  %v840 = vlaneseq
  %v841 = vshrl.u32 %v840, 7
  %v842 = vsub.s32 0, %v841
  %v843 = vrot.slane %v838, %v842
  %v845 = vadd.f32 %v828, %v843
  %v846 = vadd.f32 %v829, %v843
  %v847 = vadd.f32 %v830, %v843
  %v848 = vadd.f32 %v831, %v843
  %v849 = vadd.f32 %v832, %v843
  %v850 = vadd.f32 %v833, %v843
  %v851 = vadd.f32 %v834, %v843
  %v852 = vadd.f32 %v835, %v843
  %vm853 = vcmp.ge.f32.partialorder %v845, 0.0
  %vm854 = vcmp.ge.f32.partialorder %v846, 0.0
  %vm855 = vcmp.ge.f32.partialorder %v847, 0.0
  %vm856 = vcmp.ge.f32.partialorder %v848, 0.0
  %vm857 = vcmp.ge.f32.partialorder %v849, 0.0
  %vm858 = vcmp.ge.f32.partialorder %v850, 0.0
  %vm859 = vcmp.ge.f32.partialorder %v851, 0.0
  %vm860 = vcmp.ge.f32.partialorder %v852, 0.0
  %v861 = vmul.f32 %v845, 0.01
  %v862 = vmul.f32 %v846, 0.01
  %v863 = vmul.f32 %v847, 0.01
  %v864 = vmul.f32 %v848, 0.01
  %v865 = vmul.f32 %v849, 0.01
  %v866 = vmul.f32 %v850, 0.01
  %v867 = vmul.f32 %v851, 0.01
  %v868 = vmul.f32 %v852, 0.01
  %v869 = vsel %vm853, %v845, %v861
  %v870 = vsel %vm854, %v846, %v862
  %v871 = vsel %vm855, %v847, %v863
  %v872 = vsel %vm856, %v848, %v864
  %v873 = vsel %vm857, %v849, %v865
  %v874 = vsel %vm858, %v850, %v866
  %v875 = vsel %vm859, %v851, %v867
  %v876 = vsel %vm860, %v852, %v868
  %v877 = vld [vmem:[%s13] sm:$0x1]
  %v879 = vlaneseq
  %v880 = vshrl.u32 %v879, 7
  %v881 = vsub.s32 0, %v880
  %v882 = vrot.slane %v877, %v881
  %v884 = vmul.f32 %v869, %v882
  %v885 = vmul.f32 %v870, %v882
  %v886 = vmul.f32 %v871, %v882
  %v887 = vmul.f32 %v872, %v882
  %v888 = vmul.f32 %v873, %v882
  %v889 = vmul.f32 %v874, %v882
  %v890 = vmul.f32 %v875, %v882
  %v891 = vmul.f32 %v876, %v882
  %v892 = vsel %vm367, %v884, 0.0
  %893 = vadd.xlane.f32.xlu0 %v892
  %v894 = vpop.xlane.xlu0 %893
  %v895 = vsel %vm367, %v885, 0.0
  %896 = vadd.xlane.f32.xlu0 %v895
  %v897 = vpop.xlane.xlu0 %896
  %v898 = vsel %vm367, %v886, 0.0
  %899 = vadd.xlane.f32.xlu0 %v898
  %v900 = vpop.xlane.xlu0 %899
  %v901 = vsel %vm367, %v887, 0.0
  %902 = vadd.xlane.f32.xlu0 %v901
  %v903 = vpop.xlane.xlu0 %902
  %v904 = vsel %vm367, %v888, 0.0
  %905 = vadd.xlane.f32.xlu0 %v904
  %v906 = vpop.xlane.xlu0 %905
  %v907 = vsel %vm367, %v889, 0.0
  %908 = vadd.xlane.f32.xlu0 %v907
  %v909 = vpop.xlane.xlu0 %908
  %v910 = vsel %vm367, %v890, 0.0
  %911 = vadd.xlane.f32.xlu0 %v910
  %v912 = vpop.xlane.xlu0 %911
  %v913 = vsel %vm367, %v891, 0.0
  %914 = vadd.xlane.f32.xlu0 %v913
  %v915 = vpop.xlane.xlu0 %914
  %v916 = vld [vmem:[#allocation2] sm:$0x1]
  %v918 = vlaneseq
  %v919 = vshrl.u32 %v918, 7
  %v920 = vsub.s32 0, %v919
  %v921 = vrot.slane %v916, %v920
  %v923 = vadd.f32 %v894, %v921
  %v924 = vadd.f32 %v897, %v921
  %v925 = vadd.f32 %v900, %v921
  %v926 = vadd.f32 %v903, %v921
  %v927 = vadd.f32 %v906, %v921
  %v928 = vadd.f32 %v909, %v921
  %v929 = vadd.f32 %v912, %v921
  %v930 = vadd.f32 %v915, %v921
  %vm931 = vcmask 7168
  %932 = vst.msk [vmem:[%s15] sm:$0xff] %vm931, %v923
  %933 = vst.msk [vmem:[%s15 + $0x8] sm:$0xff] %vm931, %v924
  %934 = vst.msk [vmem:[%s15 + $0x10] sm:$0xff] %vm931, %v925
  %935 = vst.msk [vmem:[%s15 + $0x18] sm:$0xff] %vm931, %v926
  %936 = vst.msk [vmem:[%s15 + $0x20] sm:$0xff] %vm931, %v927
  %937 = vst.msk [vmem:[%s15 + $0x28] sm:$0xff] %vm931, %v928
  %938 = vst.msk [vmem:[%s15 + $0x30] sm:$0xff] %vm931, %v929
  %939 = vst.msk [vmem:[%s15 + $0x38] sm:$0xff] %vm931, %v930
  // Predicated region
  $region62: #{tpu_custom_call.1} parent=0 // pred_check
    _
  $region63: #{tpu_custom_call.1} parent=0 // pred_check_branch
    %941 = sbr.rel (0) target = $region65
  $region64: #{tpu_custom_call.1} parent=0 // pred_region
    _
  $region65: #{tpu_custom_call.1} parent=0 // pred_fallthru
    _
  // Predicated region
  $region66: #{tpu_custom_call.1} parent=0 // pred_check
    _
  $region67: #{tpu_custom_call.1} parent=0 // pred_check_branch
    %943 = sbr.rel (0) target = $region69
  $region68: #{tpu_custom_call.1} parent=0 // pred_region
    _
  $region69: #{tpu_custom_call.1} parent=0 // pred_fallthru
    _

</llo_original>
